<compile_context>
chip_gen: v7x
topology: tpu7x:2x2x1
jax: 0.10.0
libtpu: 0.0.40
codegen_flags: <defaults>
</compile_context>

<pallas_src>
import jax
import jax.numpy as jnp
from jax.experimental import pallas as pl
from jax.experimental.pallas import tpu as pltpu


def _round_up(x, m):
    return ((x + m - 1) // m) * m


def _pad2(a, rows, cols):
    return jnp.pad(a, ((0, rows - a.shape[0]), (0, cols - a.shape[1])))


def _prelu(x, a):
    # nn.PReLU() default: single shared parameter a, out = max(0,x) + a*min(0,x)
    return jnp.where(x > 0, x, a * x)


def _make_kernel(n_hidden_layers):
    """Kernel args (via PrefetchScalarGridSpec, num_scalar_prefetch=1):
         alphas_ref (SMEM, (n_hidden+1,)) f32,
         x_ref (TB, F_pad) bf16,
         [w_ref (in_pad, H_pad) bf16, b_ref (1, H_pad) f32] * n_hidden,
         w_out_ref (H_pad, O_pad) bf16, b_out_ref (1, O_pad) f32,
         o_ref (TB, O_pad) f32
    """

    def kernel(alphas_ref, x_ref, *rest):
        o_ref = rest[-1]

        # x streamed as bf16; PReLU in f32.
        h = _prelu(x_ref[...].astype(jnp.float32), alphas_ref[0])
        # self.dropout: identity (eval mode)

        idx = 0
        for layer in range(n_hidden_layers):
            w_ref, b_ref = rest[idx], rest[idx + 1]
            idx += 2
            # HiddenBlock: Linear (bf16 MXU inputs, f32 accumulate) -> PReLU -> Dropout(id)
            h = jnp.dot(h.astype(jnp.bfloat16), w_ref[...],
                        preferred_element_type=jnp.float32)
            h = _prelu(h + b_ref[...], alphas_ref[1 + layer])

        w_out_ref, b_out_ref = rest[idx], rest[idx + 1]
        out = jnp.dot(h.astype(jnp.bfloat16), w_out_ref[...],
                      preferred_element_type=jnp.float32) + b_out_ref[...]
        o_ref[...] = out.astype(o_ref.dtype)

    return kernel


def _hw_vmem_capacity_bytes():
    try:
        return int(pltpu.get_tpu_info().vmem_capacity_bytes)
    except Exception:
        return 64 << 20  # conservative: v7x per-TC VMEM


def _resident_weight_bytes(f_pad, h_pad, o_pad, n_hidden):
    w = (f_pad * h_pad + max(n_hidden - 1, 0) * h_pad * h_pad + h_pad * o_pad) * 2  # bf16
    b = (n_hidden * h_pad + o_pad) * 4                                              # f32
    return w + b


def _max_tile_batch(f_pad, h_pad, o_pad, n_hidden, cap, tile_batch_max):
    """Largest batch tile (multiple of 16) that fits next to the resident weights."""
    per_row = (2 * f_pad * 2          # double-buffered bf16 x tile
               + 2 * o_pad * 4        # double-buffered f32 out tile
               + 3 * max(f_pad, h_pad, o_pad) * 4)  # live f32 activations (+temps)
    avail = int(cap * 0.6) - _resident_weight_bytes(f_pad, h_pad, o_pad, n_hidden) - (4 << 20)
    if avail <= per_row * 16:
        return 16
    return max(16, min(tile_batch_max, (avail // per_row) // 16 * 16))


def _choose_tile_batch(batch, tb_cap):
    """Pick TB (multiple of 16) minimizing padding waste; >=2 grid steps when
    there is enough work so v7x's two TensorCores both get batch tiles."""
    b16 = _round_up(batch, 16)
    tb_cap = max(16, (tb_cap // 16) * 16)
    min_steps = 2 if b16 >= 32 else 1
    steps = max(pl.cdiv(b16, tb_cap), min_steps)
    tb = _round_up(pl.cdiv(b16, steps), 16)
    b_pad = _round_up(b16, tb)
    return tb, b_pad


def _vmem_limit_bytes(tb, f_pad, h_pad, o_pad, n_hidden, cap, w_buffers):
    w_bytes = _resident_weight_bytes(f_pad, h_pad, o_pad, n_hidden) * w_buffers
    io_bytes = 2 * tb * f_pad * 2 + 2 * tb * o_pad * 4
    act_bytes = 3 * tb * max(f_pad, h_pad, o_pad) * 4
    need = int(1.5 * (w_bytes + io_bytes + act_bytes)) + (4 << 20)
    return int(min(max(need, 8 << 20), int(cap * 0.8)))


def simple_nn_forward(x, params, *, tile_batch=1024):
    """params = dict with:
         a_in:   (1,1) PReLU weight for the input activation
         hidden: list of (w (F,H), b (1,H), a (1,1)) per hidden layer
         w_out:  (H, O), b_out: (1, O)
       Weights are stored transposed vs. torch (in_features, out_features) so
       the kernel computes h = x @ W + b on the MXU.
    """
    n_hidden = len(params["hidden"])
    batch, num_features = x.shape
    num_hidden = params["hidden"][0][0].shape[1]
    num_output = params["w_out"].shape[1]

    # Lane-dense padded dims (multiples of 128).
    f_pad = _round_up(num_features, 128)
    h_pad = _round_up(num_hidden, 128)
    o_pad = _round_up(num_output, 128)

    cap = _hw_vmem_capacity_bytes()
    # TODO(synk): stream / K-tile weights (pltpu.emit_pipeline + f32 accumulator)
    # when resident bf16 weights exceed ~0.5x VMEM (very large H on v7x); the
    # all-resident path below assumes they fit.
    tb_cap = _max_tile_batch(f_pad, h_pad, o_pad, n_hidden, cap, tile_batch)
    tb, b_pad = _choose_tile_batch(batch, tb_cap)

    # Scalar PReLU parameters -> SMEM via scalar prefetch: [a_in, a_1, ..., a_n]
    alphas = jnp.concatenate(
        [params["a_in"].reshape(1)]
        + [a.reshape(1) for (_, _, a) in params["hidden"]]
    ).astype(jnp.float32)

    # Stream x in bf16: halves the dominant HBM read; it is cast to bf16 for
    # the MXU anyway.
    x_pad = _pad2(x.astype(jnp.bfloat16), b_pad, f_pad)

    weight_tensors = []
    weight_shapes = []
    in_pad = f_pad
    for (w, b, _) in params["hidden"]:
        weight_tensors += [_pad2(w, in_pad, h_pad).astype(jnp.bfloat16),
                           _pad2(b, 1, h_pad).astype(jnp.float32)]
        weight_shapes += [(in_pad, h_pad), (1, h_pad)]
        in_pad = h_pad
    weight_tensors += [_pad2(params["w_out"], h_pad, o_pad).astype(jnp.bfloat16),
                       _pad2(params["b_out"], 1, o_pad).astype(jnp.float32)]
    weight_shapes += [(h_pad, o_pad), (1, o_pad)]

    def run(buffered_weights):
        def const_spec(shape):
            # Constant index_map => tile never changes across grid steps; a
            # single VMEM buffer suffices (default double-buffering wastes VMEM).
            if buffered_weights:
                return pl.BlockSpec(shape, lambda i, alphas_ref: (0, 0),
                                    pipeline_mode=pl.Buffered(1))
            return pl.BlockSpec(shape, lambda i, alphas_ref: (0, 0))

        in_specs = [pl.BlockSpec((tb, f_pad), lambda i, alphas_ref: (i, 0))]
        in_specs += [const_spec(s) for s in weight_shapes]

        grid_spec = pltpu.PrefetchScalarGridSpec(
            num_scalar_prefetch=1,
            grid=(b_pad // tb,),
            in_specs=in_specs,
            out_specs=pl.BlockSpec((tb, o_pad), lambda i, alphas_ref: (i, 0)),
        )
        vmem_limit = _vmem_limit_bytes(
            tb, f_pad, h_pad, o_pad, n_hidden, cap,
            w_buffers=1 if buffered_weights else 2)
        out = pl.pallas_call(
            _make_kernel(n_hidden),
            out_shape=jax.ShapeDtypeStruct((b_pad, o_pad), jnp.float32),
            grid_spec=grid_spec,
            compiler_params=pltpu.CompilerParams(
                dimension_semantics=("parallel",),
                vmem_limit_bytes=vmem_limit,
            ),
        )(alphas, x_pad, *weight_tensors)
        return jax.block_until_ready(out)

    try:
        out_pad = run(buffered_weights=True)
    except Exception:
        # Fallback if pipeline_mode=pl.Buffered(1) is rejected by this
        # jax/libtpu build: default (double-buffered) weight specs.
        out_pad = run(buffered_weights=False)

    return out_pad[:batch, :num_output]


def init_params(key, num_features, num_hidden_neurons, num_output, n_hidden_layers):
    """Deterministic init mirroring torch defaults:
       Linear: U(-1/sqrt(fan_in), 1/sqrt(fan_in)) for W and b; PReLU weight = 0.25."""
    params = {"a_in": jnp.full((1, 1), 0.25, jnp.float32), "hidden": []}
    in_f = num_features
    for _ in range(n_hidden_layers):
        key, kw, kb = jax.random.split(key, 3)
        bound = 1.0 / (in_f ** 0.5)
        w = jax.random.uniform(kw, (in_f, num_hidden_neurons), jnp.float32, -bound, bound)
        b = jax.random.uniform(kb, (1, num_hidden_neurons), jnp.float32, -bound, bound)
        a = jnp.full((1, 1), 0.25, jnp.float32)
        params["hidden"].append((w, b, a))
        in_f = num_hidden_neurons
    key, kw, kb = jax.random.split(key, 3)
    bound = 1.0 / (num_hidden_neurons ** 0.5)
    params["w_out"] = jax.random.uniform(
        kw, (num_hidden_neurons, num_output), jnp.float32, -bound, bound)
    params["b_out"] = jax.random.uniform(
        kb, (1, num_output), jnp.float32, -bound, bound)
    return params


def simple_nn_reference(x, params):
    """Pure-JAX reference with the same eval semantics and the same numerical
    policy as the kernel (bf16-streamed x, bf16 MXU inputs, f32 accumulate)."""
    h = _prelu(x.astype(jnp.bfloat16).astype(jnp.float32), params["a_in"][0, 0])
    for (w, b, a) in params["hidden"]:
        h = jnp.dot(h.astype(jnp.bfloat16), w.astype(jnp.bfloat16),
                    preferred_element_type=jnp.float32) + b
        h = _prelu(h, a[0, 0])
    return jnp.dot(h.astype(jnp.bfloat16), params["w_out"].astype(jnp.bfloat16),
                   preferred_element_type=jnp.float32) + params["b_out"]


if __name__ == "__main__":
    # Small shapes implied by the module's forward (dense features -> hidden -> output).
    batch = 8
    num_features = 16
    num_hidden_neurons = 32
    num_output = 4
    n_hidden_layers = 1
    drop_prob = 0.5  # unused in eval mode

    key = jax.random.PRNGKey(0)
    key, kx = jax.random.split(key)
    x = jax.random.normal(kx, (batch, num_features), jnp.float32)

    params = init_params(key, num_features, num_hidden_neurons, num_output, n_hidden_layers)

    out = simple_nn_forward(x, params)
    out = jax.block_until_ready(out)

    ref = simple_nn_reference(x, params)
    assert out.shape == (batch, num_output)
    assert jnp.allclose(out, ref, atol=1e-3, rtol=1e-3), (
        float(jnp.max(jnp.abs(out - ref))))

    print("KERNEL_OK")
</pallas_src>

<mosaic_0001>
module attributes {stable_mosaic.version = 11 : i64} {
  func.func @kernel(%arg0: i32, %arg1: memref<2xf32, #tpu.memory_space<smem>>, %arg2: memref<16x128xbf16, #tpu.memory_space<vmem>>, %arg3: memref<128x128xbf16, #tpu.memory_space<vmem>>, %arg4: memref<1x128xf32, #tpu.memory_space<vmem>>, %arg5: memref<128x128xbf16, #tpu.memory_space<vmem>>, %arg6: memref<1x128xf32, #tpu.memory_space<vmem>>, %arg7: memref<16x128xf32, #tpu.memory_space<vmem>>) attributes {dimension_semantics = [#tpu.dimension_semantics<parallel>], iteration_bounds = array<i64: 1>, scalar_prefetch = 1 : i64, scratch_operands = 0 : i64, tpu.core_type = #tpu.core_type<tc>, window_params = [{transform_indices = @transform_0, window_bounds = array<i64: 16, 128>}, {pipeline_mode = #tpu.pipeline_mode<synchronous>, transform_indices = @transform_1, window_bounds = array<i64: 128, 128>}, {pipeline_mode = #tpu.pipeline_mode<synchronous>, transform_indices = @transform_2, window_bounds = array<i64: 1, 128>}, {pipeline_mode = #tpu.pipeline_mode<synchronous>, transform_indices = @transform_3, window_bounds = array<i64: 128, 128>}, {pipeline_mode = #tpu.pipeline_mode<synchronous>, transform_indices = @transform_4, window_bounds = array<i64: 1, 128>}, {transform_indices = @transform_5, window_bounds = array<i64: 16, 128>}]} {
    %c0 = arith.constant 0 : index
    %c0_0 = arith.constant 0 : index
    %0 = vector.load %arg2[%c0, %c0_0] : memref<16x128xbf16, #tpu.memory_space<vmem>>, vector<16x128xbf16>
    %1 = arith.extf %0 : vector<16x128xbf16> to vector<16x128xf32>
    %c0_1 = arith.constant 0 : index
    %2 = memref.load %arg1[%c0_1] : memref<2xf32, #tpu.memory_space<smem>>
    %cst = arith.constant 0.000000e+00 : f32
    %3 = vector.broadcast %cst : f32 to vector<16x128xf32>
    %4 = arith.cmpf ogt, %1, %3 : vector<16x128xf32>
    %5 = vector.broadcast %2 : f32 to vector<16x128xf32>
    %6 = arith.mulf %5, %1 : vector<16x128xf32>
    %7 = arith.select %4, %1, %6 : vector<16x128xi1>, vector<16x128xf32>
    %8 = arith.truncf %7 : vector<16x128xf32> to vector<16x128xbf16>
    %c0_2 = arith.constant 0 : index
    %c0_3 = arith.constant 0 : index
    %9 = vector.load %arg3[%c0_2, %c0_3] : memref<128x128xbf16, #tpu.memory_space<vmem>>, vector<128x128xbf16>
    %cst_4 = arith.constant dense<0.000000e+00> : vector<16x128xf32>
    %10 = tpu.matmul %8, %9, %cst_4 {dimension_numbers = #tpu.dot_dimension_numbers<[1], [0], [0], [1], [0, 0, 1, 1], [], []>} : vector<16x128xbf16>, vector<128x128xbf16>, vector<16x128xf32> -> vector<16x128xf32>
    %c0_5 = arith.constant 0 : index
    %c0_6 = arith.constant 0 : index
    %11 = vector.load %arg4[%c0_5, %c0_6] : memref<1x128xf32, #tpu.memory_space<vmem>>, vector<1x128xf32>
    %12 = vector.broadcast %11 : vector<1x128xf32> to vector<16x128xf32>
    %13 = arith.addf %10, %12 : vector<16x128xf32>
    %c1 = arith.constant 1 : index
    %14 = memref.load %arg1[%c1] : memref<2xf32, #tpu.memory_space<smem>>
    %cst_7 = arith.constant 0.000000e+00 : f32
    %15 = vector.broadcast %cst_7 : f32 to vector<16x128xf32>
    %16 = arith.cmpf ogt, %13, %15 : vector<16x128xf32>
    %17 = vector.broadcast %14 : f32 to vector<16x128xf32>
    %18 = arith.mulf %17, %13 : vector<16x128xf32>
    %19 = arith.select %16, %13, %18 : vector<16x128xi1>, vector<16x128xf32>
    %20 = arith.truncf %19 : vector<16x128xf32> to vector<16x128xbf16>
    %c0_8 = arith.constant 0 : index
    %c0_9 = arith.constant 0 : index
    %21 = vector.load %arg5[%c0_8, %c0_9] : memref<128x128xbf16, #tpu.memory_space<vmem>>, vector<128x128xbf16>
    %cst_10 = arith.constant dense<0.000000e+00> : vector<16x128xf32>
    %22 = tpu.matmul %20, %21, %cst_10 {dimension_numbers = #tpu.dot_dimension_numbers<[1], [0], [0], [1], [0, 0, 1, 1], [], []>} : vector<16x128xbf16>, vector<128x128xbf16>, vector<16x128xf32> -> vector<16x128xf32>
    %c0_11 = arith.constant 0 : index
    %c0_12 = arith.constant 0 : index
    %23 = vector.load %arg6[%c0_11, %c0_12] : memref<1x128xf32, #tpu.memory_space<vmem>>, vector<1x128xf32>
    %24 = vector.broadcast %23 : vector<1x128xf32> to vector<16x128xf32>
    %25 = arith.addf %22, %24 : vector<16x128xf32>
    %c0_13 = arith.constant 0 : index
    %c0_14 = arith.constant 0 : index
    %26 = vector.load %arg7[%c0_13, %c0_14] : memref<16x128xf32, #tpu.memory_space<vmem>>, vector<16x128xf32>
    tpu.vector_store %arg7[%c0_13, %c0_14], %25 {strides = array<i32>} : memref<16x128xf32, #tpu.memory_space<vmem>>, vector<16x128xf32>,
    return
  }
  func.func @transform_0(%arg0: i32, %arg1: memref<2xf32, #tpu.memory_space<smem>>) -> (i32, i32) {
    %c0_i32 = arith.constant 0 : i32
    %c0_i32_0 = arith.constant 0 : i32
    return %arg0, %c0_i32 : i32, i32
  }
  func.func @transform_1(%arg0: i32, %arg1: memref<2xf32, #tpu.memory_space<smem>>) -> (i32, i32) {
    %c0_i32 = arith.constant 0 : i32
    %c0_i32_0 = arith.constant 0 : i32
    %c0_i32_1 = arith.constant 0 : i32
    return %c0_i32, %c0_i32_0 : i32, i32
  }
  func.func @transform_2(%arg0: i32, %arg1: memref<2xf32, #tpu.memory_space<smem>>) -> (i32, i32) {
    %c0_i32 = arith.constant 0 : i32
    %c0_i32_0 = arith.constant 0 : i32
    %c0_i32_1 = arith.constant 0 : i32
    return %c0_i32, %c0_i32_0 : i32, i32
  }
  func.func @transform_3(%arg0: i32, %arg1: memref<2xf32, #tpu.memory_space<smem>>) -> (i32, i32) {
    %c0_i32 = arith.constant 0 : i32
    %c0_i32_0 = arith.constant 0 : i32
    %c0_i32_1 = arith.constant 0 : i32
    return %c0_i32, %c0_i32_0 : i32, i32
  }
  func.func @transform_4(%arg0: i32, %arg1: memref<2xf32, #tpu.memory_space<smem>>) -> (i32, i32) {
    %c0_i32 = arith.constant 0 : i32
    %c0_i32_0 = arith.constant 0 : i32
    %c0_i32_1 = arith.constant 0 : i32
    return %c0_i32, %c0_i32_0 : i32, i32
  }
  func.func @transform_5(%arg0: i32, %arg1: memref<2xf32, #tpu.memory_space<smem>>) -> (i32, i32) {
    %c0_i32 = arith.constant 0 : i32
    %c0_i32_0 = arith.constant 0 : i32
    return %arg0, %c0_i32 : i32, i32
  }
}

module attributes {stable_mosaic.version = 11 : i64} {
  func.func @kernel(%arg0: i32, %arg1: memref<2xf32, #tpu.memory_space<smem>>, %arg2: memref<16x128xbf16, #tpu.memory_space<vmem>>, %arg3: memref<128x128xbf16, #tpu.memory_space<vmem>>, %arg4: memref<1x128xf32, #tpu.memory_space<vmem>>, %arg5: memref<128x128xbf16, #tpu.memory_space<vmem>>, %arg6: memref<1x128xf32, #tpu.memory_space<vmem>>, %arg7: memref<16x128xf32, #tpu.memory_space<vmem>>) attributes {dimension_semantics = [#tpu.dimension_semantics<parallel>], iteration_bounds = array<i64: 1>, scalar_prefetch = 1 : i64, scratch_operands = 0 : i64, tpu.core_type = #tpu.core_type<tc>, window_params = [{transform_indices = @transform_0, window_bounds = array<i64: 16, 128>}, {pipeline_mode = #tpu.pipeline_mode<synchronous>, transform_indices = @transform_1, window_bounds = array<i64: 128, 128>}, {pipeline_mode = #tpu.pipeline_mode<synchronous>, transform_indices = @transform_2, window_bounds = array<i64: 1, 128>}, {pipeline_mode = #tpu.pipeline_mode<synchronous>, transform_indices = @transform_3, window_bounds = array<i64: 128, 128>}, {pipeline_mode = #tpu.pipeline_mode<synchronous>, transform_indices = @transform_4, window_bounds = array<i64: 1, 128>}, {transform_indices = @transform_5, window_bounds = array<i64: 16, 128>}]} {
    %c0 = arith.constant 0 : index
    %c0_0 = arith.constant 0 : index
    %0 = vector.load %arg2[%c0, %c0_0] : memref<16x128xbf16, #tpu.memory_space<vmem>>, vector<16x128xbf16>
    %1 = arith.extf %0 : vector<16x128xbf16> to vector<16x128xf32>
    %c0_1 = arith.constant 0 : index
    %2 = memref.load %arg1[%c0_1] : memref<2xf32, #tpu.memory_space<smem>>
    %cst = arith.constant 0.000000e+00 : f32
    %3 = vector.broadcast %cst : f32 to vector<16x128xf32>
    %4 = arith.cmpf ogt, %1, %3 : vector<16x128xf32>
    %5 = vector.broadcast %2 : f32 to vector<16x128xf32>
    %6 = arith.mulf %5, %1 : vector<16x128xf32>
    %7 = arith.select %4, %1, %6 : vector<16x128xi1>, vector<16x128xf32>
    %8 = arith.truncf %7 : vector<16x128xf32> to vector<16x128xbf16>
    %c0_2 = arith.constant 0 : index
    %c0_3 = arith.constant 0 : index
    %9 = vector.load %arg3[%c0_2, %c0_3] : memref<128x128xbf16, #tpu.memory_space<vmem>>, vector<128x128xbf16>
    %cst_4 = arith.constant dense<0.000000e+00> : vector<16x128xf32>
    %10 = tpu.matmul %8, %9, %cst_4 {dimension_numbers = #tpu.dot_dimension_numbers<[1], [0], [0], [1], [0, 0, 1, 1], [], []>} : vector<16x128xbf16>, vector<128x128xbf16>, vector<16x128xf32> -> vector<16x128xf32>
    %c0_5 = arith.constant 0 : index
    %c0_6 = arith.constant 0 : index
    %11 = vector.load %arg4[%c0_5, %c0_6] : memref<1x128xf32, #tpu.memory_space<vmem>>, vector<1x128xf32>
    %12 = vector.broadcast %11 : vector<1x128xf32> to vector<16x128xf32>
    %13 = arith.addf %10, %12 : vector<16x128xf32>
    %c1 = arith.constant 1 : index
    %14 = memref.load %arg1[%c1] : memref<2xf32, #tpu.memory_space<smem>>
    %cst_7 = arith.constant 0.000000e+00 : f32
    %15 = vector.broadcast %cst_7 : f32 to vector<16x128xf32>
    %16 = arith.cmpf ogt, %13, %15 : vector<16x128xf32>
    %17 = vector.broadcast %14 : f32 to vector<16x128xf32>
    %18 = arith.mulf %17, %13 : vector<16x128xf32>
    %19 = arith.select %16, %13, %18 : vector<16x128xi1>, vector<16x128xf32>
    %20 = arith.truncf %19 : vector<16x128xf32> to vector<16x128xbf16>
    %c0_8 = arith.constant 0 : index
    %c0_9 = arith.constant 0 : index
    %21 = vector.load %arg5[%c0_8, %c0_9] : memref<128x128xbf16, #tpu.memory_space<vmem>>, vector<128x128xbf16>
    %cst_10 = arith.constant dense<0.000000e+00> : vector<16x128xf32>
    %22 = tpu.matmul %20, %21, %cst_10 {dimension_numbers = #tpu.dot_dimension_numbers<[1], [0], [0], [1], [0, 0, 1, 1], [], []>} : vector<16x128xbf16>, vector<128x128xbf16>, vector<16x128xf32> -> vector<16x128xf32>
    %c0_11 = arith.constant 0 : index
    %c0_12 = arith.constant 0 : index
    %23 = vector.load %arg6[%c0_11, %c0_12] : memref<1x128xf32, #tpu.memory_space<vmem>>, vector<1x128xf32>
    %24 = vector.broadcast %23 : vector<1x128xf32> to vector<16x128xf32>
    %25 = arith.addf %22, %24 : vector<16x128xf32>
    %c0_13 = arith.constant 0 : index
    %c0_14 = arith.constant 0 : index
    %26 = vector.load %arg7[%c0_13, %c0_14] : memref<16x128xf32, #tpu.memory_space<vmem>>, vector<16x128xf32>
    tpu.vector_store %arg7[%c0_13, %c0_14], %25 {strides = array<i32>} : memref<16x128xf32, #tpu.memory_space<vmem>>, vector<16x128xf32>,
    return
  }
  func.func @transform_0(%arg0: i32, %arg1: memref<2xf32, #tpu.memory_space<smem>>) -> (i32, i32) {
    %c0_i32 = arith.constant 0 : i32
    %c0_i32_0 = arith.constant 0 : i32
    return %arg0, %c0_i32 : i32, i32
  }
  func.func @transform_1(%arg0: i32, %arg1: memref<2xf32, #tpu.memory_space<smem>>) -> (i32, i32) {
    %c0_i32 = arith.constant 0 : i32
    %c0_i32_0 = arith.constant 0 : i32
    %c0_i32_1 = arith.constant 0 : i32
    return %c0_i32, %c0_i32_0 : i32, i32
  }
  func.func @transform_2(%arg0: i32, %arg1: memref<2xf32, #tpu.memory_space<smem>>) -> (i32, i32) {
    %c0_i32 = arith.constant 0 : i32
    %c0_i32_0 = arith.constant 0 : i32
    %c0_i32_1 = arith.constant 0 : i32
    return %c0_i32, %c0_i32_0 : i32, i32
  }
  func.func @transform_3(%arg0: i32, %arg1: memref<2xf32, #tpu.memory_space<smem>>) -> (i32, i32) {
    %c0_i32 = arith.constant 0 : i32
    %c0_i32_0 = arith.constant 0 : i32
    %c0_i32_1 = arith.constant 0 : i32
    return %c0_i32, %c0_i32_0 : i32, i32
  }
  func.func @transform_4(%arg0: i32, %arg1: memref<2xf32, #tpu.memory_space<smem>>) -> (i32, i32) {
    %c0_i32 = arith.constant 0 : i32
    %c0_i32_0 = arith.constant 0 : i32
    %c0_i32_1 = arith.constant 0 : i32
    return %c0_i32, %c0_i32_0 : i32, i32
  }
  func.func @transform_5(%arg0: i32, %arg1: memref<2xf32, #tpu.memory_space<smem>>) -> (i32, i32) {
    %c0_i32 = arith.constant 0 : i32
    %c0_i32_0 = arith.constant 0 : i32
    return %arg0, %c0_i32 : i32, i32
  }
}

</mosaic_0001>

<llo_original>
// kernel: tpu_custom_call.1
$region0: #{tpu_custom_call.1}
  #allocation0 [shape = 'u32[]', space=smem, size = 0x4, offset = 0x4, fixed_abs, tag = 'smem constant byte address 0x4 - core index']
  #allocation1 [shape = 'u32[144,128]{1,0:T(1,128)}', space=vmem, size = 0x12000, scoped, tag = 'internal scratch']
  #allocation2 [shape = 's32[1]{0}', space=sflag, size = 0x4, scoped, tag = 'scoped memory for tpu_custom_call.1']
  #allocation3 [shape = 'u8[512]{0}', space=smem, size = 0x200, scoped, tag = 'prefetched SMEM operand 0']
  %s0 = inlined_call_operand.hbm [shape: f32[2], index: 0, kind: input, shape index: {}]
  %s1 = inlined_call_operand.hbm [shape: bf16[16,128], index: 1, kind: input, shape index: {}]
  %s2 = inlined_call_operand.hbm [shape: bf16[128,128], index: 2, kind: input, shape index: {}]
  %s3 = inlined_call_operand.vmem [shape: f32[1,128], index: 3, kind: input, shape index: {}]
  %s4 = inlined_call_operand.hbm [shape: bf16[128,128], index: 4, kind: input, shape index: {}]
  %s5 = inlined_call_operand.vmem [shape: f32[1,128], index: 5, kind: input, shape index: {}]
  %s6 = inlined_call_operand.hbm [shape: f32[16,128], index: 6, kind: output, shape index: {}]
  %s7 = sld [smem:[#allocation0]]
  $region42: #{tpu_custom_call.1} parent=0
    _
  %s9 = ssub.s32 1, %s7
  %s10 = scalar_select 0, %s9, %s7
  %12 = dma.hbm_to_smem %s0, 16, [#allocation3], [#allocation2]
  %13 = dma.done [#allocation2], 16
  %14 = sfence
  $region1: #{tpu_custom_call.1} parent=0
    #allocation4 [shape = 'u8[4096]{0}', space=vmem, size = 0x1000, scoped, tag = 'input window, operand 1, single buffered']
    #allocation5 [shape = 's32[1]{0}', space=sflag, size = 0x4, scoped, tag = 'scoped memory for tpu_custom_call.1']
    #allocation6 [shape = 's32[1]{0}', space=sflag, size = 0x4, scoped, tag = 'scoped memory for tpu_custom_call.1']
    #allocation7 [shape = 'u8[32768]{0}', space=vmem, size = 0x8000, scoped, tag = 'input window, operand 2, single buffered']
    #allocation8 [shape = 's32[1]{0}', space=sflag, size = 0x4, scoped, tag = 'scoped memory for tpu_custom_call.1']
    #allocation9 [shape = 'u8[32768]{0}', space=vmem, size = 0x8000, scoped, tag = 'input window, operand 4, single buffered']
    #allocation10 [shape = 'u8[8192]{0}', space=vmem, size = 0x2000, scoped, tag = 'output window, operand 0, single buffered']
    %15 = vsyncpa [#allocation5], 0
    %16 = vsyncpa [#allocation8], 0
    %17 = vsyncpa [#allocation6], 0
    // Predicated region
    $region2: #{tpu_custom_call.1} parent=1 // pred_check
      _
    $region3: #{tpu_custom_call.1} parent=1 // pred_check_branch
      %19 = sbr.rel (0) target = $region5
    $region4: #{tpu_custom_call.1} parent=1 // pred_region
      %s21 = ssub.s32 128, 128
      %22 = vsyncadd [#allocation5], %s21
      %s23 = sshll.u32 [#allocation4], 4
      %s24 = int_to_ptr.vmem [resolvable:$true] %s23
      %29 = dma.hbm_to_vmem [thread:$0]  %s1, 128, %s24, [#allocation5], 64, 64, 4
    $region5: #{tpu_custom_call.1} parent=1 // pred_fallthru
      _
    // Predicated region
    $region6: #{tpu_custom_call.1} parent=1 // pred_check
      _
    $region7: #{tpu_custom_call.1} parent=1 // pred_check_branch
      %31 = sbr.rel (0) target = $region9
    $region8: #{tpu_custom_call.1} parent=1 // pred_region
      %s33 = ssub.s32 1024, 1024
      %34 = vsyncadd [#allocation8], %s33
      %s35 = sshll.u32 [#allocation7], 4
      %s36 = int_to_ptr.vmem [resolvable:$true] %s35
      %41 = dma.hbm_to_vmem [thread:$0]  %s2, 1024, %s36, [#allocation8], 64, 64, 4
    $region9: #{tpu_custom_call.1} parent=1 // pred_fallthru
      _
    // Predicated region
    $region10: #{tpu_custom_call.1} parent=1 // pred_check
      _
    $region11: #{tpu_custom_call.1} parent=1 // pred_check_branch
      %43 = sbr.rel (0) target = $region13
    $region12: #{tpu_custom_call.1} parent=1 // pred_region
      _
    $region13: #{tpu_custom_call.1} parent=1 // pred_fallthru
      _
    // Predicated region
    $region14: #{tpu_custom_call.1} parent=1 // pred_check
      _
    $region15: #{tpu_custom_call.1} parent=1 // pred_check_branch
      %45 = sbr.rel (0) target = $region17
    $region16: #{tpu_custom_call.1} parent=1 // pred_region
      %s47 = ssub.s32 1024, 1024
      %48 = vsyncadd [#allocation8], %s47
      %s49 = sshll.u32 [#allocation9], 4
      %s50 = int_to_ptr.vmem [resolvable:$true] %s49
      %55 = dma.hbm_to_vmem [thread:$0]  %s4, 1024, %s50, [#allocation8], 64, 64, 4
    $region17: #{tpu_custom_call.1} parent=1 // pred_fallthru
      _
    // Predicated region
    $region18: #{tpu_custom_call.1} parent=1 // pred_check
      _
    $region19: #{tpu_custom_call.1} parent=1 // pred_check_branch
      %57 = sbr.rel (0) target = $region21
    $region20: #{tpu_custom_call.1} parent=1 // pred_region
      _
    $region21: #{tpu_custom_call.1} parent=1 // pred_fallthru
      _
    // Predicated region
    $region22: #{tpu_custom_call.1} parent=1 // pred_check
      _
    $region23: #{tpu_custom_call.1} parent=1 // pred_check_branch
      %59 = sbr.rel (0) target = $region25
    $region24: #{tpu_custom_call.1} parent=1 // pred_region
      %60 = dma.done [#allocation5], 128
    $region25: #{tpu_custom_call.1} parent=1 // pred_fallthru
      _
    // Predicated region
    $region26: #{tpu_custom_call.1} parent=1 // pred_check
      _
    $region27: #{tpu_custom_call.1} parent=1 // pred_check_branch
      %62 = sbr.rel (0) target = $region29
    $region28: #{tpu_custom_call.1} parent=1 // pred_region
      %63 = dma.done [#allocation8], 1024
    $region29: #{tpu_custom_call.1} parent=1 // pred_fallthru
      _
    // Predicated region
    $region30: #{tpu_custom_call.1} parent=1 // pred_check
      _
    $region31: #{tpu_custom_call.1} parent=1 // pred_check_branch
      %65 = sbr.rel (0) target = $region33
    $region32: #{tpu_custom_call.1} parent=1 // pred_region
      %66 = dma.done [#allocation8], 1024
    $region33: #{tpu_custom_call.1} parent=1 // pred_fallthru
      _
    %v68 = vld [vmem:[#allocation4] sm:$0xf]
    %v69 = vld [vmem:[#allocation4 + $0x4] sm:$0xf]
    %v70 = vunpack.c.l.bf16 %v68
    %v71 = vunpack.c.l.bf16 %v69
    %s72 = sld [smem:[#allocation3]]
    %vm73 = vcmp.gt.f32.partialorder %v70, 0.0
    %vm74 = vcmp.gt.f32.partialorder %v71, 0.0
    %v75 = vstv %s72
    %v76 = vmul.f32 %v75, %v70
    %v77 = vmul.f32 %v75, %v71
    %v78 = vsel %vm73, %v70, %v76
    %v79 = vsel %vm74, %v71, %v77
    %v80 = vpack.c.bf16 %v79, %v78
    %v81 = vld [vmem:[#allocation7] sm:$0xf]
    %v82 = vld [vmem:[#allocation7 + $0x4] sm:$0xf]
    %v83 = vld [vmem:[#allocation7 + $0x8] sm:$0xf]
    %v84 = vld [vmem:[#allocation7 + $0xc] sm:$0xf]
    %v85 = vld [vmem:[#allocation7 + $0x10] sm:$0xf]
    %v86 = vld [vmem:[#allocation7 + $0x14] sm:$0xf]
    %v87 = vld [vmem:[#allocation7 + $0x18] sm:$0xf]
    %v88 = vld [vmem:[#allocation7 + $0x1c] sm:$0xf]
    %v89 = vld [vmem:[#allocation7 + $0x20] sm:$0xf]
    %v90 = vld [vmem:[#allocation7 + $0x24] sm:$0xf]
    %v91 = vld [vmem:[#allocation7 + $0x28] sm:$0xf]
    %v92 = vld [vmem:[#allocation7 + $0x2c] sm:$0xf]
    %v93 = vld [vmem:[#allocation7 + $0x30] sm:$0xf]
    %v94 = vld [vmem:[#allocation7 + $0x34] sm:$0xf]
    %v95 = vld [vmem:[#allocation7 + $0x38] sm:$0xf]
    %v96 = vld [vmem:[#allocation7 + $0x3c] sm:$0xf]
    %v97 = vld [vmem:[%s3] sm:$0x1]
    %v99 = vlaneseq
    %v100 = vshrl.u32 %v99, 7
    %v101 = vsub.s32 0, %v100
    %v102 = vrot.slane %v97, %v101
    %v120 = vunpack.c.l.b16 %v81
    %v121 = vunpack.c.l.b16 %v82
    %v122 = vunpack.c.l.b16 %v83
    %v123 = vunpack.c.l.b16 %v84
    %v124 = vunpack.c.l.b16 %v85
    %v125 = vunpack.c.l.b16 %v86
    %v126 = vunpack.c.l.b16 %v87
    %v127 = vunpack.c.l.b16 %v88
    %v128 = vunpack.c.l.b16 %v89
    %v129 = vunpack.c.l.b16 %v90
    %v130 = vunpack.c.l.b16 %v91
    %v131 = vunpack.c.l.b16 %v92
    %v132 = vunpack.c.l.b16 %v93
    %v133 = vunpack.c.l.b16 %v94
    %v134 = vunpack.c.l.b16 %v95
    %v135 = vunpack.c.l.b16 %v96
    %v136 = vpack.c.b16 %v121, %v120
    %v137 = vpack.c.b16 %v123, %v122
    %v138 = vpack.c.b16 %v125, %v124
    %v139 = vpack.c.b16 %v127, %v126
    %v140 = vpack.c.b16 %v129, %v128
    %v141 = vpack.c.b16 %v131, %v130
    %v142 = vpack.c.b16 %v133, %v132
    %v143 = vpack.c.b16 %v135, %v134
    %152 = vmatprep.subr.bf16.mxu0 0
    %153 = vmatpush1.bf16.msra.mxu0 %v136
    %154 = vmatprep.subr.bf16.mxu0 0
    %155 = vmatpush1.bf16.msra.mxu0 %v137
    %156 = vmatprep.subr.bf16.mxu0 0
    %157 = vmatpush1.bf16.msra.mxu0 %v138
    %158 = vmatprep.subr.bf16.mxu0 0
    %159 = vmatpush1.bf16.msra.mxu0 %v139
    %160 = vmatprep.subr.bf16.mxu0 0
    %161 = vmatpush1.bf16.msra.mxu0 %v140
    %162 = vmatprep.subr.bf16.mxu0 0
    %163 = vmatpush1.bf16.msra.mxu0 %v141
    %164 = vmatprep.subr.bf16.mxu0 0
    %165 = vmatpush1.bf16.msra.mxu0 %v142
    %166 = vmatprep.subr.bf16.mxu0 0
    %167 = vmatpush1.bf16.msra.mxu0 %v143
    %168 = vmatprep.subr.bf16.mxu0 0
    %169 = vmatpush1.bf16.msra.mxu0 0
    %170 = vmatprep.subr.bf16.mxu0 0
    %171 = vmatpush1.bf16.msra.mxu0 0
    %172 = vmatprep.subr.bf16.mxu0 0
    %173 = vmatpush1.bf16.msra.mxu0 0
    %174 = vmatprep.subr.bf16.mxu0 0
    %175 = vmatpush1.bf16.msra.mxu0 0
    %176 = vmatprep.subr.bf16.mxu0 0
    %177 = vmatpush1.bf16.msra.mxu0 0
    %178 = vmatprep.subr.bf16.mxu0 0
    %179 = vmatpush1.bf16.msra.mxu0 0
    %180 = vmatprep.subr.bf16.mxu0 0
    %181 = vmatpush1.bf16.msra.mxu0 0
    %182 = vmatprep.subr.bf16.mxu0 0
    %183 = vmatpush1.bf16.msra.mxu0 0
    %184 = vmatprep.mubr.bf16.mxu0 0
    %185 = vmatmul.mubr.bf16.gmra.mrb[0].mxu0 %v80
    %v186 = vpop.f32.mrb[0].mxu0
    %v187 = vadd.f32 %v102, %v186
    %v188 = vpop.f32.mrb[0].mxu0
    %v189 = vpop.f32.mrb[0].mxu0
    %v190 = vadd.f32 %v102, %v189
    %v191 = vpop.f32.mrb[0].mxu0
    %192 = vdwg.mxu0
    %s193 = sld [smem:[#allocation3 + $0x1]]
    %vm194 = vcmp.gt.f32.partialorder %v187, 0.0
    %vm195 = vcmp.gt.f32.partialorder %v190, 0.0
    %v196 = vstv %s193
    %v197 = vmul.f32 %v196, %v187
    %v198 = vmul.f32 %v196, %v190
    %v199 = vsel %vm194, %v187, %v197
    %v200 = vsel %vm195, %v190, %v198
    %v201 = vpack.c.bf16 %v200, %v199
    %v202 = vld [vmem:[#allocation9] sm:$0xf]
    %v203 = vld [vmem:[#allocation9 + $0x4] sm:$0xf]
    %v204 = vld [vmem:[#allocation9 + $0x8] sm:$0xf]
    %v205 = vld [vmem:[#allocation9 + $0xc] sm:$0xf]
    %v206 = vld [vmem:[#allocation9 + $0x10] sm:$0xf]
    %v207 = vld [vmem:[#allocation9 + $0x14] sm:$0xf]
    %v208 = vld [vmem:[#allocation9 + $0x18] sm:$0xf]
    %v209 = vld [vmem:[#allocation9 + $0x1c] sm:$0xf]
    %v210 = vld [vmem:[#allocation9 + $0x20] sm:$0xf]
    %v211 = vld [vmem:[#allocation9 + $0x24] sm:$0xf]
    %v212 = vld [vmem:[#allocation9 + $0x28] sm:$0xf]
    %v213 = vld [vmem:[#allocation9 + $0x2c] sm:$0xf]
    %v214 = vld [vmem:[#allocation9 + $0x30] sm:$0xf]
    %v215 = vld [vmem:[#allocation9 + $0x34] sm:$0xf]
    %v216 = vld [vmem:[#allocation9 + $0x38] sm:$0xf]
    %v217 = vld [vmem:[#allocation9 + $0x3c] sm:$0xf]
    %v218 = vld [vmem:[%s5] sm:$0x1]
    %v220 = vlaneseq
    %v221 = vshrl.u32 %v220, 7
    %v222 = vsub.s32 0, %v221
    %v223 = vrot.slane %v218, %v222
    %v241 = vunpack.c.l.b16 %v202
    %v242 = vunpack.c.l.b16 %v203
    %v243 = vunpack.c.l.b16 %v204
    %v244 = vunpack.c.l.b16 %v205
    %v245 = vunpack.c.l.b16 %v206
    %v246 = vunpack.c.l.b16 %v207
    %v247 = vunpack.c.l.b16 %v208
    %v248 = vunpack.c.l.b16 %v209
    %v249 = vunpack.c.l.b16 %v210
    %v250 = vunpack.c.l.b16 %v211
    %v251 = vunpack.c.l.b16 %v212
    %v252 = vunpack.c.l.b16 %v213
    %v253 = vunpack.c.l.b16 %v214
    %v254 = vunpack.c.l.b16 %v215
    %v255 = vunpack.c.l.b16 %v216
    %v256 = vunpack.c.l.b16 %v217
    %v257 = vpack.c.b16 %v242, %v241
    %v258 = vpack.c.b16 %v244, %v243
    %v259 = vpack.c.b16 %v246, %v245
    %v260 = vpack.c.b16 %v248, %v247
    %v261 = vpack.c.b16 %v250, %v249
    %v262 = vpack.c.b16 %v252, %v251
    %v263 = vpack.c.b16 %v254, %v253
    %v264 = vpack.c.b16 %v256, %v255
    %273 = vmatprep.subr.bf16.mxu0 0
    %274 = vmatpush1.bf16.msra.mxu0 %v257
    %275 = vmatprep.subr.bf16.mxu0 0
    %276 = vmatpush1.bf16.msra.mxu0 %v258
    %277 = vmatprep.subr.bf16.mxu0 0
    %278 = vmatpush1.bf16.msra.mxu0 %v259
    %279 = vmatprep.subr.bf16.mxu0 0
    %280 = vmatpush1.bf16.msra.mxu0 %v260
    %281 = vmatprep.subr.bf16.mxu0 0
    %282 = vmatpush1.bf16.msra.mxu0 %v261
    %283 = vmatprep.subr.bf16.mxu0 0
    %284 = vmatpush1.bf16.msra.mxu0 %v262
    %285 = vmatprep.subr.bf16.mxu0 0
    %286 = vmatpush1.bf16.msra.mxu0 %v263
    %287 = vmatprep.subr.bf16.mxu0 0
    %288 = vmatpush1.bf16.msra.mxu0 %v264
    %289 = vmatprep.subr.bf16.mxu0 0
    %290 = vmatpush1.bf16.msra.mxu0 0
    %291 = vmatprep.subr.bf16.mxu0 0
    %292 = vmatpush1.bf16.msra.mxu0 0
    %293 = vmatprep.subr.bf16.mxu0 0
    %294 = vmatpush1.bf16.msra.mxu0 0
    %295 = vmatprep.subr.bf16.mxu0 0
    %296 = vmatpush1.bf16.msra.mxu0 0
    %297 = vmatprep.subr.bf16.mxu0 0
    %298 = vmatpush1.bf16.msra.mxu0 0
    %299 = vmatprep.subr.bf16.mxu0 0
    %300 = vmatpush1.bf16.msra.mxu0 0
    %301 = vmatprep.subr.bf16.mxu0 0
    %302 = vmatpush1.bf16.msra.mxu0 0
    %303 = vmatprep.subr.bf16.mxu0 0
    %304 = vmatpush1.bf16.msra.mxu0 0
    %305 = vmatprep.mubr.bf16.mxu0 0
    %306 = vmatmul.mubr.bf16.gmra.mrb[0].mxu0 %v201
    %v307 = vpop.f32.mrb[0].mxu0
    %v308 = vadd.f32 %v223, %v307
    %v309 = vpop.f32.mrb[0].mxu0
    %v310 = vpop.f32.mrb[0].mxu0
    %v311 = vadd.f32 %v223, %v310
    %v312 = vpop.f32.mrb[0].mxu0
    %313 = vdwg.mxu0
    %314 = vst [vmem:[#allocation10] sm:$0xff] %v308
    %315 = vst [vmem:[#allocation10 + $0x8] sm:$0xff] %v311
    // Predicated region
    $region34: #{tpu_custom_call.1} parent=1 // pred_check
      _
    $region35: #{tpu_custom_call.1} parent=1 // pred_check_branch
      %317 = sbr.rel (0) target = $region37
    $region36: #{tpu_custom_call.1} parent=1 // pred_region
      %s319 = ssub.s32 256, 256
      %320 = vsyncadd [#allocation6], %s319
      %s321 = sshll.u32 [#allocation10], 4
      %s322 = int_to_ptr.vmem [resolvable:$true] %s321
      %327 = dma.vmem_to_hbm [thread:$0]  %s322, 256, %s6, [#allocation6], 128, 128, 8
    $region37: #{tpu_custom_call.1} parent=1 // pred_fallthru
      _
    // Predicated region
    $region38: #{tpu_custom_call.1} parent=1 // pred_check
      _
    $region39: #{tpu_custom_call.1} parent=1 // pred_check_branch
      %329 = sbr.rel (0) target = $region41
    $region40: #{tpu_custom_call.1} parent=1 // pred_region
      %330 = dma.done [#allocation6], 256
    $region41: #{tpu_custom_call.1} parent=1 // pred_fallthru
      _
    %331 = vsyncpa [#allocation5], 1
    %332 = vsyncpa [#allocation8], 1
    %333 = vsyncpa [#allocation6], 1

// kernel: tpu_custom_call.1
$region0: #{tpu_custom_call.1}
  #allocation0 [shape = 'u32[]', space=smem, size = 0x4, offset = 0x4, fixed_abs, tag = 'smem constant byte address 0x4 - core index']
  #allocation1 [shape = 'u32[144,128]{1,0:T(1,128)}', space=vmem, size = 0x12000, scoped, tag = 'internal scratch']
  #allocation2 [shape = 's32[1]{0}', space=sflag, size = 0x4, scoped, tag = 'scoped memory for tpu_custom_call.1']
  #allocation3 [shape = 'u8[512]{0}', space=smem, size = 0x200, scoped, tag = 'prefetched SMEM operand 0']
  %s0 = inlined_call_operand.hbm [shape: f32[2], index: 0, kind: input, shape index: {}]
  %s1 = inlined_call_operand.hbm [shape: bf16[16,128], index: 1, kind: input, shape index: {}]
  %s2 = inlined_call_operand.hbm [shape: bf16[128,128], index: 2, kind: input, shape index: {}]
  %s3 = inlined_call_operand.vmem [shape: f32[1,128], index: 3, kind: input, shape index: {}]
  %s4 = inlined_call_operand.hbm [shape: bf16[128,128], index: 4, kind: input, shape index: {}]
  %s5 = inlined_call_operand.vmem [shape: f32[1,128], index: 5, kind: input, shape index: {}]
  %s6 = inlined_call_operand.hbm [shape: f32[16,128], index: 6, kind: output, shape index: {}]
  %s7 = sld [smem:[#allocation0]]
  $region42: #{tpu_custom_call.1} parent=0
    _
  %s9 = ssub.s32 1, %s7
  %s10 = scalar_select 0, %s9, %s7
  %12 = dma.hbm_to_smem %s0, 16, [#allocation3], [#allocation2]
  %13 = dma.done [#allocation2], 16
  %14 = sfence
  $region1: #{tpu_custom_call.1} parent=0
    #allocation4 [shape = 'u8[4096]{0}', space=vmem, size = 0x1000, scoped, tag = 'input window, operand 1, single buffered']
    #allocation5 [shape = 's32[1]{0}', space=sflag, size = 0x4, scoped, tag = 'scoped memory for tpu_custom_call.1']
    #allocation6 [shape = 's32[1]{0}', space=sflag, size = 0x4, scoped, tag = 'scoped memory for tpu_custom_call.1']
    #allocation7 [shape = 'u8[32768]{0}', space=vmem, size = 0x8000, scoped, tag = 'input window, operand 2, single buffered']
    #allocation8 [shape = 's32[1]{0}', space=sflag, size = 0x4, scoped, tag = 'scoped memory for tpu_custom_call.1']
    #allocation9 [shape = 'u8[32768]{0}', space=vmem, size = 0x8000, scoped, tag = 'input window, operand 4, single buffered']
    #allocation10 [shape = 'u8[8192]{0}', space=vmem, size = 0x2000, scoped, tag = 'output window, operand 0, single buffered']
    %15 = vsyncpa [#allocation5], 0
    %16 = vsyncpa [#allocation8], 0
    %17 = vsyncpa [#allocation6], 0
    // Predicated region
    $region2: #{tpu_custom_call.1} parent=1 // pred_check
      _
    $region3: #{tpu_custom_call.1} parent=1 // pred_check_branch
      %19 = sbr.rel (0) target = $region5
    $region4: #{tpu_custom_call.1} parent=1 // pred_region
      %s21 = ssub.s32 128, 128
      %22 = vsyncadd [#allocation5], %s21
      %s23 = sshll.u32 [#allocation4], 4
      %s24 = int_to_ptr.vmem [resolvable:$true] %s23
      %29 = dma.hbm_to_vmem [thread:$0]  %s1, 128, %s24, [#allocation5], 64, 64, 4
    $region5: #{tpu_custom_call.1} parent=1 // pred_fallthru
      _
    // Predicated region
    $region6: #{tpu_custom_call.1} parent=1 // pred_check
      _
    $region7: #{tpu_custom_call.1} parent=1 // pred_check_branch
      %31 = sbr.rel (0) target = $region9
    $region8: #{tpu_custom_call.1} parent=1 // pred_region
      %s33 = ssub.s32 1024, 1024
      %34 = vsyncadd [#allocation8], %s33
      %s35 = sshll.u32 [#allocation7], 4
      %s36 = int_to_ptr.vmem [resolvable:$true] %s35
      %41 = dma.hbm_to_vmem [thread:$0]  %s2, 1024, %s36, [#allocation8], 64, 64, 4
    $region9: #{tpu_custom_call.1} parent=1 // pred_fallthru
      _
    // Predicated region
    $region10: #{tpu_custom_call.1} parent=1 // pred_check
      _
    $region11: #{tpu_custom_call.1} parent=1 // pred_check_branch
      %43 = sbr.rel (0) target = $region13
    $region12: #{tpu_custom_call.1} parent=1 // pred_region
      _
    $region13: #{tpu_custom_call.1} parent=1 // pred_fallthru
      _
    // Predicated region
    $region14: #{tpu_custom_call.1} parent=1 // pred_check
      _
    $region15: #{tpu_custom_call.1} parent=1 // pred_check_branch
      %45 = sbr.rel (0) target = $region17
    $region16: #{tpu_custom_call.1} parent=1 // pred_region
      %s47 = ssub.s32 1024, 1024
      %48 = vsyncadd [#allocation8], %s47
      %s49 = sshll.u32 [#allocation9], 4
      %s50 = int_to_ptr.vmem [resolvable:$true] %s49
      %55 = dma.hbm_to_vmem [thread:$0]  %s4, 1024, %s50, [#allocation8], 64, 64, 4
    $region17: #{tpu_custom_call.1} parent=1 // pred_fallthru
      _
    // Predicated region
    $region18: #{tpu_custom_call.1} parent=1 // pred_check
      _
    $region19: #{tpu_custom_call.1} parent=1 // pred_check_branch
      %57 = sbr.rel (0) target = $region21
    $region20: #{tpu_custom_call.1} parent=1 // pred_region
      _
    $region21: #{tpu_custom_call.1} parent=1 // pred_fallthru
      _
    // Predicated region
    $region22: #{tpu_custom_call.1} parent=1 // pred_check
      _
    $region23: #{tpu_custom_call.1} parent=1 // pred_check_branch
      %59 = sbr.rel (0) target = $region25
    $region24: #{tpu_custom_call.1} parent=1 // pred_region
      %60 = dma.done [#allocation5], 128
    $region25: #{tpu_custom_call.1} parent=1 // pred_fallthru
      _
    // Predicated region
    $region26: #{tpu_custom_call.1} parent=1 // pred_check
      _
    $region27: #{tpu_custom_call.1} parent=1 // pred_check_branch
      %62 = sbr.rel (0) target = $region29
    $region28: #{tpu_custom_call.1} parent=1 // pred_region
      %63 = dma.done [#allocation8], 1024
    $region29: #{tpu_custom_call.1} parent=1 // pred_fallthru
      _
    // Predicated region
    $region30: #{tpu_custom_call.1} parent=1 // pred_check
      _
    $region31: #{tpu_custom_call.1} parent=1 // pred_check_branch
      %65 = sbr.rel (0) target = $region33
    $region32: #{tpu_custom_call.1} parent=1 // pred_region
      %66 = dma.done [#allocation8], 1024
    $region33: #{tpu_custom_call.1} parent=1 // pred_fallthru
      _
    %v68 = vld [vmem:[#allocation4] sm:$0xf]
    %v69 = vld [vmem:[#allocation4 + $0x4] sm:$0xf]
    %v70 = vunpack.c.l.bf16 %v68
    %v71 = vunpack.c.l.bf16 %v69
    %s72 = sld [smem:[#allocation3]]
    %vm73 = vcmp.gt.f32.partialorder %v70, 0.0
    %vm74 = vcmp.gt.f32.partialorder %v71, 0.0
    %v75 = vstv %s72
    %v76 = vmul.f32 %v75, %v70
    %v77 = vmul.f32 %v75, %v71
    %v78 = vsel %vm73, %v70, %v76
    %v79 = vsel %vm74, %v71, %v77
    %v80 = vpack.c.bf16 %v79, %v78
    %v81 = vld [vmem:[#allocation7] sm:$0xf]
    %v82 = vld [vmem:[#allocation7 + $0x4] sm:$0xf]
    %v83 = vld [vmem:[#allocation7 + $0x8] sm:$0xf]
    %v84 = vld [vmem:[#allocation7 + $0xc] sm:$0xf]
    %v85 = vld [vmem:[#allocation7 + $0x10] sm:$0xf]
    %v86 = vld [vmem:[#allocation7 + $0x14] sm:$0xf]
    %v87 = vld [vmem:[#allocation7 + $0x18] sm:$0xf]
    %v88 = vld [vmem:[#allocation7 + $0x1c] sm:$0xf]
    %v89 = vld [vmem:[#allocation7 + $0x20] sm:$0xf]
    %v90 = vld [vmem:[#allocation7 + $0x24] sm:$0xf]
    %v91 = vld [vmem:[#allocation7 + $0x28] sm:$0xf]
    %v92 = vld [vmem:[#allocation7 + $0x2c] sm:$0xf]
    %v93 = vld [vmem:[#allocation7 + $0x30] sm:$0xf]
    %v94 = vld [vmem:[#allocation7 + $0x34] sm:$0xf]
    %v95 = vld [vmem:[#allocation7 + $0x38] sm:$0xf]
    %v96 = vld [vmem:[#allocation7 + $0x3c] sm:$0xf]
    %v97 = vld [vmem:[%s3] sm:$0x1]
    %v99 = vlaneseq
    %v100 = vshrl.u32 %v99, 7
    %v101 = vsub.s32 0, %v100
    %v102 = vrot.slane %v97, %v101
    %v120 = vunpack.c.l.b16 %v81
    %v121 = vunpack.c.l.b16 %v82
    %v122 = vunpack.c.l.b16 %v83
    %v123 = vunpack.c.l.b16 %v84
    %v124 = vunpack.c.l.b16 %v85
    %v125 = vunpack.c.l.b16 %v86
    %v126 = vunpack.c.l.b16 %v87
    %v127 = vunpack.c.l.b16 %v88
    %v128 = vunpack.c.l.b16 %v89
    %v129 = vunpack.c.l.b16 %v90
    %v130 = vunpack.c.l.b16 %v91
    %v131 = vunpack.c.l.b16 %v92
    %v132 = vunpack.c.l.b16 %v93
    %v133 = vunpack.c.l.b16 %v94
    %v134 = vunpack.c.l.b16 %v95
    %v135 = vunpack.c.l.b16 %v96
    %v136 = vpack.c.b16 %v121, %v120
    %v137 = vpack.c.b16 %v123, %v122
    %v138 = vpack.c.b16 %v125, %v124
    %v139 = vpack.c.b16 %v127, %v126
    %v140 = vpack.c.b16 %v129, %v128
    %v141 = vpack.c.b16 %v131, %v130
    %v142 = vpack.c.b16 %v133, %v132
    %v143 = vpack.c.b16 %v135, %v134
    %152 = vmatprep.subr.bf16.mxu0 0
    %153 = vmatpush1.bf16.msra.mxu0 %v136
    %154 = vmatprep.subr.bf16.mxu0 0
    %155 = vmatpush1.bf16.msra.mxu0 %v137
    %156 = vmatprep.subr.bf16.mxu0 0
    %157 = vmatpush1.bf16.msra.mxu0 %v138
    %158 = vmatprep.subr.bf16.mxu0 0
    %159 = vmatpush1.bf16.msra.mxu0 %v139
    %160 = vmatprep.subr.bf16.mxu0 0
    %161 = vmatpush1.bf16.msra.mxu0 %v140
    %162 = vmatprep.subr.bf16.mxu0 0
    %163 = vmatpush1.bf16.msra.mxu0 %v141
    %164 = vmatprep.subr.bf16.mxu0 0
    %165 = vmatpush1.bf16.msra.mxu0 %v142
    %166 = vmatprep.subr.bf16.mxu0 0
    %167 = vmatpush1.bf16.msra.mxu0 %v143
    %168 = vmatprep.subr.bf16.mxu0 0
    %169 = vmatpush1.bf16.msra.mxu0 0
    %170 = vmatprep.subr.bf16.mxu0 0
    %171 = vmatpush1.bf16.msra.mxu0 0
    %172 = vmatprep.subr.bf16.mxu0 0
    %173 = vmatpush1.bf16.msra.mxu0 0
    %174 = vmatprep.subr.bf16.mxu0 0
    %175 = vmatpush1.bf16.msra.mxu0 0
    %176 = vmatprep.subr.bf16.mxu0 0
    %177 = vmatpush1.bf16.msra.mxu0 0
    %178 = vmatprep.subr.bf16.mxu0 0
    %179 = vmatpush1.bf16.msra.mxu0 0
    %180 = vmatprep.subr.bf16.mxu0 0
    %181 = vmatpush1.bf16.msra.mxu0 0
    %182 = vmatprep.subr.bf16.mxu0 0
    %183 = vmatpush1.bf16.msra.mxu0 0
    %184 = vmatprep.mubr.bf16.mxu0 0
    %185 = vmatmul.mubr.bf16.gmra.mrb[0].mxu0 %v80
    %v186 = vpop.f32.mrb[0].mxu0
    %v187 = vadd.f32 %v102, %v186
    %v188 = vpop.f32.mrb[0].mxu0
    %v189 = vpop.f32.mrb[0].mxu0
    %v190 = vadd.f32 %v102, %v189
    %v191 = vpop.f32.mrb[0].mxu0
    %192 = vdwg.mxu0
    %s193 = sld [smem:[#allocation3 + $0x1]]
    %vm194 = vcmp.gt.f32.partialorder %v187, 0.0
    %vm195 = vcmp.gt.f32.partialorder %v190, 0.0
    %v196 = vstv %s193
    %v197 = vmul.f32 %v196, %v187
    %v198 = vmul.f32 %v196, %v190
    %v199 = vsel %vm194, %v187, %v197
    %v200 = vsel %vm195, %v190, %v198
    %v201 = vpack.c.bf16 %v200, %v199
    %v202 = vld [vmem:[#allocation9] sm:$0xf]
    %v203 = vld [vmem:[#allocation9 + $0x4] sm:$0xf]
    %v204 = vld [vmem:[#allocation9 + $0x8] sm:$0xf]
    %v205 = vld [vmem:[#allocation9 + $0xc] sm:$0xf]
    %v206 = vld [vmem:[#allocation9 + $0x10] sm:$0xf]
    %v207 = vld [vmem:[#allocation9 + $0x14] sm:$0xf]
    %v208 = vld [vmem:[#allocation9 + $0x18] sm:$0xf]
    %v209 = vld [vmem:[#allocation9 + $0x1c] sm:$0xf]
    %v210 = vld [vmem:[#allocation9 + $0x20] sm:$0xf]
    %v211 = vld [vmem:[#allocation9 + $0x24] sm:$0xf]
    %v212 = vld [vmem:[#allocation9 + $0x28] sm:$0xf]
    %v213 = vld [vmem:[#allocation9 + $0x2c] sm:$0xf]
    %v214 = vld [vmem:[#allocation9 + $0x30] sm:$0xf]
    %v215 = vld [vmem:[#allocation9 + $0x34] sm:$0xf]
    %v216 = vld [vmem:[#allocation9 + $0x38] sm:$0xf]
    %v217 = vld [vmem:[#allocation9 + $0x3c] sm:$0xf]
    %v218 = vld [vmem:[%s5] sm:$0x1]
    %v220 = vlaneseq
    %v221 = vshrl.u32 %v220, 7
    %v222 = vsub.s32 0, %v221
    %v223 = vrot.slane %v218, %v222
    %v241 = vunpack.c.l.b16 %v202
    %v242 = vunpack.c.l.b16 %v203
    %v243 = vunpack.c.l.b16 %v204
    %v244 = vunpack.c.l.b16 %v205
    %v245 = vunpack.c.l.b16 %v206
    %v246 = vunpack.c.l.b16 %v207
    %v247 = vunpack.c.l.b16 %v208
    %v248 = vunpack.c.l.b16 %v209
    %v249 = vunpack.c.l.b16 %v210
    %v250 = vunpack.c.l.b16 %v211
    %v251 = vunpack.c.l.b16 %v212
    %v252 = vunpack.c.l.b16 %v213
    %v253 = vunpack.c.l.b16 %v214
    %v254 = vunpack.c.l.b16 %v215
    %v255 = vunpack.c.l.b16 %v216
    %v256 = vunpack.c.l.b16 %v217
    %v257 = vpack.c.b16 %v242, %v241
    %v258 = vpack.c.b16 %v244, %v243
    %v259 = vpack.c.b16 %v246, %v245
    %v260 = vpack.c.b16 %v248, %v247
    %v261 = vpack.c.b16 %v250, %v249
    %v262 = vpack.c.b16 %v252, %v251
    %v263 = vpack.c.b16 %v254, %v253
    %v264 = vpack.c.b16 %v256, %v255
    %273 = vmatprep.subr.bf16.mxu0 0
    %274 = vmatpush1.bf16.msra.mxu0 %v257
    %275 = vmatprep.subr.bf16.mxu0 0
    %276 = vmatpush1.bf16.msra.mxu0 %v258
    %277 = vmatprep.subr.bf16.mxu0 0
    %278 = vmatpush1.bf16.msra.mxu0 %v259
    %279 = vmatprep.subr.bf16.mxu0 0
    %280 = vmatpush1.bf16.msra.mxu0 %v260
    %281 = vmatprep.subr.bf16.mxu0 0
    %282 = vmatpush1.bf16.msra.mxu0 %v261
    %283 = vmatprep.subr.bf16.mxu0 0
    %284 = vmatpush1.bf16.msra.mxu0 %v262
    %285 = vmatprep.subr.bf16.mxu0 0
    %286 = vmatpush1.bf16.msra.mxu0 %v263
    %287 = vmatprep.subr.bf16.mxu0 0
    %288 = vmatpush1.bf16.msra.mxu0 %v264
    %289 = vmatprep.subr.bf16.mxu0 0
    %290 = vmatpush1.bf16.msra.mxu0 0
    %291 = vmatprep.subr.bf16.mxu0 0
    %292 = vmatpush1.bf16.msra.mxu0 0
    %293 = vmatprep.subr.bf16.mxu0 0
    %294 = vmatpush1.bf16.msra.mxu0 0
    %295 = vmatprep.subr.bf16.mxu0 0
    %296 = vmatpush1.bf16.msra.mxu0 0
    %297 = vmatprep.subr.bf16.mxu0 0
    %298 = vmatpush1.bf16.msra.mxu0 0
    %299 = vmatprep.subr.bf16.mxu0 0
    %300 = vmatpush1.bf16.msra.mxu0 0
    %301 = vmatprep.subr.bf16.mxu0 0
    %302 = vmatpush1.bf16.msra.mxu0 0
    %303 = vmatprep.subr.bf16.mxu0 0
    %304 = vmatpush1.bf16.msra.mxu0 0
    %305 = vmatprep.mubr.bf16.mxu0 0
    %306 = vmatmul.mubr.bf16.gmra.mrb[0].mxu0 %v201
    %v307 = vpop.f32.mrb[0].mxu0
    %v308 = vadd.f32 %v223, %v307
    %v309 = vpop.f32.mrb[0].mxu0
    %v310 = vpop.f32.mrb[0].mxu0
    %v311 = vadd.f32 %v223, %v310
    %v312 = vpop.f32.mrb[0].mxu0
    %313 = vdwg.mxu0
    %314 = vst [vmem:[#allocation10] sm:$0xff] %v308
    %315 = vst [vmem:[#allocation10 + $0x8] sm:$0xff] %v311
    // Predicated region
    $region34: #{tpu_custom_call.1} parent=1 // pred_check
      _
    $region35: #{tpu_custom_call.1} parent=1 // pred_check_branch
      %317 = sbr.rel (0) target = $region37
    $region36: #{tpu_custom_call.1} parent=1 // pred_region
      %s319 = ssub.s32 256, 256
      %320 = vsyncadd [#allocation6], %s319
      %s321 = sshll.u32 [#allocation10], 4
      %s322 = int_to_ptr.vmem [resolvable:$true] %s321
      %327 = dma.vmem_to_hbm [thread:$0]  %s322, 256, %s6, [#allocation6], 128, 128, 8
    $region37: #{tpu_custom_call.1} parent=1 // pred_fallthru
      _
    // Predicated region
    $region38: #{tpu_custom_call.1} parent=1 // pred_check
      _
    $region39: #{tpu_custom_call.1} parent=1 // pred_check_branch
      %329 = sbr.rel (0) target = $region41
    $region40: #{tpu_custom_call.1} parent=1 // pred_region
      %330 = dma.done [#allocation6], 256
    $region41: #{tpu_custom_call.1} parent=1 // pred_fallthru
      _
    %331 = vsyncpa [#allocation5], 1
    %332 = vsyncpa [#allocation8], 1
    %333 = vsyncpa [#allocation6], 1

</llo_original>
